<compile_context>
chip_gen: v7x
topology: tpu7x:2x2x1
jax: 0.10.0
libtpu: 0.0.40
codegen_flags: <defaults>
</compile_context>

<pallas_src>
import functools

import jax
import jax.numpy as jnp
from jax.experimental import pallas as pl
from jax.experimental.pallas import tpu as pltpu

N_LAYERS = 9        # hidden1..hidden8 + predict
N_RELU = 8          # layers followed by ReLU
N_MID = N_RELU - 1  # hidden2..hidden8 (square H->H layers)
LANE = 128
SUBLANE_BF16 = 16   # bf16 vreg holds [16, 128]


def _round_up(n, m):
    return (n + m - 1) // m * m


def _cdiv(a, b):
    return -(-a // b)


# ---------------------------------------------------------------------------
# Kernel: one packed batch tile (TM, P*F) -> (TM, P*O), weights VMEM-resident.
# Every weight is block-diagonal with P independent copies, so the P samples
# packed into one 128-lane row never mix; bias add + ReLU are elementwise.
# ---------------------------------------------------------------------------
def _mlp_kernel(x_ref, w_in_ref, w_mid_ref, w_out_ref, b_hid_ref, b_out_ref, o_ref):
    # x_ref:     (TM, P*F)  f32   packed input (P samples per row)
    # w_in_ref:  (P*F, D)   bf16  block-diag hidden1 weight
    # w_mid_ref: (7, D, D)  bf16  block-diag hidden2..hidden8 weights
    # w_out_ref: (D, P*O)   bf16  block-diag predict weight
    # b_hid_ref: (8, D)     f32   packed biases for layers 1..8
    # b_out_ref: (1, P*O)   f32   packed predict bias
    # o_ref:     (TM, P*O)  f32   packed output (compact writeback)
    x = x_ref[...].astype(jnp.bfloat16)                      # in-kernel cast (no host pad)
    z = jnp.dot(x, w_in_ref[...], preferred_element_type=jnp.float32)
    h = jnp.maximum(z + b_hid_ref[pl.ds(0, 1), :], 0.0).astype(jnp.bfloat16)
    for i in range(N_MID):                                   # unrolled; MXU bf16 -> f32 acc
        z = jnp.dot(h, w_mid_ref[i], preferred_element_type=jnp.float32)
        h = jnp.maximum(z + b_hid_ref[pl.ds(i + 1, 1), :], 0.0).astype(jnp.bfloat16)
    out = jnp.dot(h, w_out_ref[...], preferred_element_type=jnp.float32)
    o_ref[...] = out + b_out_ref[...]


# ---------------------------------------------------------------------------
# One-time parameter preparation: PyTorch (out,in) layout -> P-way block-diag
# bf16 weight stacks + packed f32 biases.
# ---------------------------------------------------------------------------
def _pack_block_diag(w, row_stride, col_stride, n_copies):
    r, c = w.shape
    out = jnp.zeros((n_copies * row_stride, n_copies * col_stride), jnp.float32)
    for j in range(n_copies):
        out = out.at[j * row_stride:j * row_stride + r,
                     j * col_stride:j * col_stride + c].set(w)
    return out


def _pack_bias(b, stride, n_copies):
    out = jnp.zeros((n_copies * stride,), jnp.float32)
    for j in range(n_copies):
        out = out.at[j * stride:j * stride + b.shape[0]].set(b)
    return out


def prepare_params(params):
    w1, b1 = params["w1"], params["b1"]          # (H, F), (H,)
    wm, bm = params["wm"], params["bm"]          # 7 x (H, H), 7 x (H,)
    wo, bo = params["wo"], params["bo"]          # (O, H), (O,)
    H, F = w1.shape
    O = wo.shape[0]

    # Packing factor: largest power-of-two P with P * H <= 128 (P >= 1).
    P = 1
    while H <= LANE and (2 * P) * H <= LANE:
        P *= 2
    G = LANE // P if H <= LANE else _round_up(H, LANE)   # per-sample hidden block width
    D = P * G                                            # packed lane width (128 if H<=128)

    w_in = _pack_block_diag(w1.T, F, G, P).astype(jnp.bfloat16)               # (P*F, D)
    w_mid = jnp.stack([_pack_block_diag(w.T, G, G, P) for w in wm],
                      axis=0).astype(jnp.bfloat16)                            # (7, D, D)
    w_out = _pack_block_diag(wo.T, G, O, P).astype(jnp.bfloat16)              # (D, P*O)
    b_hid = jnp.stack([_pack_bias(b, G, P) for b in [b1] + list(bm)],
                      axis=0).astype(jnp.float32)                             # (8, D)
    b_out = _pack_bias(bo, O, P).astype(jnp.float32).reshape(1, P * O)        # (1, P*O)
    return {"w_in": w_in, "w_mid": w_mid, "w_out": w_out,
            "b_hid": b_hid, "b_out": b_out}


# ---------------------------------------------------------------------------
# Forward wrapper: pack P samples per row, launch the grid, unpack the output.
# ---------------------------------------------------------------------------
@functools.partial(jax.jit, static_argnames=("tm",))
def net_forward(x, w_in, w_mid, w_out, b_hid, b_out, *, tm=1024):
    B, F = x.shape
    PF, D = w_in.shape
    PO = w_out.shape[1]
    P = PF // F
    O = PO // P

    rows = _cdiv(B, P)                           # packed rows carrying real samples
    if rows <= SUBLANE_BF16:
        TM = _round_up(rows, SUBLANE_BF16)       # tiny batch: single tile
    else:
        # >= 2 grid steps so dimension_semantics=("parallel",) can use both v7x TCs.
        TM = _round_up(min(tm, _cdiv(rows, 2)), SUBLANE_BF16)
    rows_pad = _round_up(rows, TM)
    Bpad = rows_pad * P
    grid = (rows_pad // TM,)

    # Only cheap host-side work: batch-row pad + row-major P-sample packing.
    x_packed = jnp.pad(x, ((0, Bpad - B), (0, 0))).reshape(rows_pad, PF)

    flops = 2 * rows_pad * (PF * D + N_MID * D * D + D * PO)
    bytes_accessed = (x_packed.size * 4 + w_in.size * 2 + w_mid.size * 2
                      + w_out.size * 2 + b_hid.size * 4 + b_out.size * 4
                      + rows_pad * PO * 4)

    out_packed = pl.pallas_call(
        _mlp_kernel,
        out_shape=jax.ShapeDtypeStruct((rows_pad, PO), jnp.float32),
        grid=grid,
        in_specs=[
            pl.BlockSpec((TM, PF), lambda i: (i, 0)),           # streamed packed input
            pl.BlockSpec((PF, D), lambda i: (0, 0)),            # resident weights / biases
            pl.BlockSpec((N_MID, D, D), lambda i: (0, 0, 0)),
            pl.BlockSpec((D, PO), lambda i: (0, 0)),
            pl.BlockSpec((N_RELU, D), lambda i: (0, 0)),
            pl.BlockSpec((1, PO), lambda i: (0, 0)),
        ],
        out_specs=pl.BlockSpec((TM, PO), lambda i: (i, 0)),     # compact packed output
        compiler_params=pltpu.CompilerParams(
            dimension_semantics=("parallel",)),
        cost_estimate=pl.CostEstimate(
            flops=flops, transcendentals=0, bytes_accessed=bytes_accessed),
    )(x_packed, w_in, w_mid, w_out, b_hid, b_out)

    # Unpack: packed row r, lanes [j*O:(j+1)*O) hold sample r*P + j.
    return out_packed.reshape(Bpad, O)[:B]


# ---------------------------------------------------------------------------
# Deterministic synthetic init (PyTorch-Linear-like 1/sqrt(fan_in)) + references.
# ---------------------------------------------------------------------------
def _init_linear(key, n_out, n_in):
    kw, kb = jax.random.split(key)
    bound = 1.0 / jnp.sqrt(jnp.float32(n_in))
    w = jax.random.uniform(kw, (n_out, n_in), jnp.float32, -bound, bound)
    b = jax.random.uniform(kb, (n_out,), jnp.float32, -bound, bound)
    return w, b


def make_params(key, nfeature, nhidden, noutput):
    keys = jax.random.split(key, N_LAYERS)
    w1, b1 = _init_linear(keys[0], nhidden, nfeature)
    wm, bm = [], []
    for i in range(N_MID):
        w, b = _init_linear(keys[1 + i], nhidden, nhidden)
        wm.append(w)
        bm.append(b)
    wo, bo = _init_linear(keys[N_LAYERS - 1], noutput, nhidden)
    return {"w1": w1, "b1": b1, "wm": wm, "bm": bm, "wo": wo, "bo": bo}


def net_forward_ref_f32(x, params):
    # Pure-f32 PyTorch semantics: y = x @ W.T + b, ReLU on all but the last layer.
    h = jnp.maximum(x @ params["w1"].T + params["b1"], 0.0)
    for w, b in zip(params["wm"], params["bm"]):
        h = jnp.maximum(h @ w.T + b, 0.0)
    return h @ params["wo"].T + params["bo"]


def net_forward_ref_bf16(x, params):
    # Same precision split as the kernel: bf16 matmul inputs, f32 accumulate,
    # f32 bias + ReLU, bf16 re-cast between layers.
    ws = [params["w1"]] + list(params["wm"]) + [params["wo"]]
    bs = [params["b1"]] + list(params["bm"]) + [params["bo"]]
    h = x.astype(jnp.bfloat16)
    for i in range(N_RELU):
        z = jnp.dot(h, ws[i].T.astype(jnp.bfloat16),
                    preferred_element_type=jnp.float32) + bs[i]
        h = jnp.maximum(z, 0.0).astype(jnp.bfloat16)
    return jnp.dot(h, ws[-1].T.astype(jnp.bfloat16),
                   preferred_element_type=jnp.float32) + bs[-1]


if __name__ == "__main__":
    # Small shapes consistent with Net(nfeature, nhidden, noutput)
    batch, nfeature, nhidden, noutput = 16, 4, 32, 4

    key = jax.random.PRNGKey(0)
    kx, kp_key = jax.random.split(key)
    x = jax.random.normal(kx, (batch, nfeature), jnp.float32)
    params = make_params(kp_key, nfeature, nhidden, noutput)

    kp = prepare_params(params)   # one-time, kernel-ready block-diag packed layout

    out = net_forward(x, kp["w_in"], kp["w_mid"], kp["w_out"], kp["b_hid"], kp["b_out"])
    out = jax.block_until_ready(out)
    assert out.shape == (batch, noutput)

    # Tight check against a bf16-precision-matched reference.
    ref_bf16 = net_forward_ref_bf16(x, params)
    assert jnp.allclose(out, ref_bf16, atol=1e-3, rtol=1e-3)

    # Loose sanity check against the full-f32 PyTorch-semantics reference.
    ref_f32 = net_forward_ref_f32(x, params)
    assert jnp.allclose(out, ref_f32, atol=5e-2, rtol=5e-2)

    print("KERNEL_OK")
</pallas_src>

<mosaic_0001>
module attributes {stable_mosaic.version = 11 : i64} {
  func.func @_mlp_kernel(%arg0: i32, %arg1: memref<16x16xf32, #tpu.memory_space<vmem>>, %arg2: memref<16x128xbf16, #tpu.memory_space<vmem>>, %arg3: memref<7x128x128xbf16, #tpu.memory_space<vmem>>, %arg4: memref<128x16xbf16, #tpu.memory_space<vmem>>, %arg5: memref<8x128xf32, #tpu.memory_space<vmem>>, %arg6: memref<1x16xf32, #tpu.memory_space<vmem>>, %arg7: memref<16x16xf32, #tpu.memory_space<vmem>>) attributes {dimension_semantics = [#tpu.dimension_semantics<parallel>], iteration_bounds = array<i64: 1>, scalar_prefetch = 0 : i64, scratch_operands = 0 : i64, tpu.core_type = #tpu.core_type<tc>, window_params = [{transform_indices = @transform_0, window_bounds = array<i64: 16, 16>}, {pipeline_mode = #tpu.pipeline_mode<synchronous>, transform_indices = @transform_1, window_bounds = array<i64: 16, 128>}, {pipeline_mode = #tpu.pipeline_mode<synchronous>, transform_indices = @transform_2, window_bounds = array<i64: 7, 128, 128>}, {pipeline_mode = #tpu.pipeline_mode<synchronous>, transform_indices = @transform_3, window_bounds = array<i64: 128, 16>}, {pipeline_mode = #tpu.pipeline_mode<synchronous>, transform_indices = @transform_4, window_bounds = array<i64: 8, 128>}, {pipeline_mode = #tpu.pipeline_mode<synchronous>, transform_indices = @transform_5, window_bounds = array<i64: 1, 16>}, {transform_indices = @transform_6, window_bounds = array<i64: 16, 16>}]} {
    %c0 = arith.constant 0 : index
    %c0_0 = arith.constant 0 : index
    %0 = vector.load %arg1[%c0, %c0_0] : memref<16x16xf32, #tpu.memory_space<vmem>>, vector<16x16xf32>
    %1 = arith.truncf %0 : vector<16x16xf32> to vector<16x16xbf16>
    %c0_1 = arith.constant 0 : index
    %c0_2 = arith.constant 0 : index
    %2 = vector.load %arg2[%c0_1, %c0_2] : memref<16x128xbf16, #tpu.memory_space<vmem>>, vector<16x128xbf16>
    %cst = arith.constant dense<0.000000e+00> : vector<16x128xf32>
    %3 = tpu.matmul %1, %2, %cst {dimension_numbers = #tpu.dot_dimension_numbers<[1], [0], [0], [1], [0, 0, 1, 1], [], []>} : vector<16x16xbf16>, vector<16x128xbf16>, vector<16x128xf32> -> vector<16x128xf32>
    %c0_3 = arith.constant 0 : index
    %c0_4 = arith.constant 0 : index
    %4 = vector.load %arg5[%c0_3, %c0_4] : memref<8x128xf32, #tpu.memory_space<vmem>>, vector<1x128xf32>
    %5 = vector.broadcast %4 : vector<1x128xf32> to vector<16x128xf32>
    %6 = arith.addf %3, %5 : vector<16x128xf32>
    %cst_5 = arith.constant 0.000000e+00 : f32
    %7 = vector.broadcast %cst_5 : f32 to vector<16x128xf32>
    %8 = arith.maximumf %6, %7 : vector<16x128xf32>
    %9 = arith.truncf %8 : vector<16x128xf32> to vector<16x128xbf16>
    %c0_6 = arith.constant 0 : index
    %c0_7 = arith.constant 0 : index
    %c0_8 = arith.constant 0 : index
    %10 = vector.load %arg3[%c0_6, %c0_7, %c0_8] : memref<7x128x128xbf16, #tpu.memory_space<vmem>>, vector<1x128x128xbf16>
    %11 = vector.shape_cast %10 : vector<1x128x128xbf16> to vector<128x128xbf16>
    %cst_9 = arith.constant dense<0.000000e+00> : vector<16x128xf32>
    %12 = tpu.matmul %9, %11, %cst_9 {dimension_numbers = #tpu.dot_dimension_numbers<[1], [0], [0], [1], [0, 0, 1, 1], [], []>} : vector<16x128xbf16>, vector<128x128xbf16>, vector<16x128xf32> -> vector<16x128xf32>
    %c1 = arith.constant 1 : index
    %c0_10 = arith.constant 0 : index
    %13 = vector.load %arg5[%c1, %c0_10] : memref<8x128xf32, #tpu.memory_space<vmem>>, vector<1x128xf32>
    %14 = vector.broadcast %13 : vector<1x128xf32> to vector<16x128xf32>
    %15 = arith.addf %12, %14 : vector<16x128xf32>
    %cst_11 = arith.constant 0.000000e+00 : f32
    %16 = vector.broadcast %cst_11 : f32 to vector<16x128xf32>
    %17 = arith.maximumf %15, %16 : vector<16x128xf32>
    %18 = arith.truncf %17 : vector<16x128xf32> to vector<16x128xbf16>
    %c1_12 = arith.constant 1 : index
    %c0_13 = arith.constant 0 : index
    %c0_14 = arith.constant 0 : index
    %19 = vector.load %arg3[%c1_12, %c0_13, %c0_14] : memref<7x128x128xbf16, #tpu.memory_space<vmem>>, vector<1x128x128xbf16>
    %20 = vector.shape_cast %19 : vector<1x128x128xbf16> to vector<128x128xbf16>
    %cst_15 = arith.constant dense<0.000000e+00> : vector<16x128xf32>
    %21 = tpu.matmul %18, %20, %cst_15 {dimension_numbers = #tpu.dot_dimension_numbers<[1], [0], [0], [1], [0, 0, 1, 1], [], []>} : vector<16x128xbf16>, vector<128x128xbf16>, vector<16x128xf32> -> vector<16x128xf32>
    %c2 = arith.constant 2 : index
    %c0_16 = arith.constant 0 : index
    %22 = vector.load %arg5[%c2, %c0_16] : memref<8x128xf32, #tpu.memory_space<vmem>>, vector<1x128xf32>
    %23 = vector.broadcast %22 : vector<1x128xf32> to vector<16x128xf32>
    %24 = arith.addf %21, %23 : vector<16x128xf32>
    %cst_17 = arith.constant 0.000000e+00 : f32
    %25 = vector.broadcast %cst_17 : f32 to vector<16x128xf32>
    %26 = arith.maximumf %24, %25 : vector<16x128xf32>
    %27 = arith.truncf %26 : vector<16x128xf32> to vector<16x128xbf16>
    %c2_18 = arith.constant 2 : index
    %c0_19 = arith.constant 0 : index
    %c0_20 = arith.constant 0 : index
    %28 = vector.load %arg3[%c2_18, %c0_19, %c0_20] : memref<7x128x128xbf16, #tpu.memory_space<vmem>>, vector<1x128x128xbf16>
    %29 = vector.shape_cast %28 : vector<1x128x128xbf16> to vector<128x128xbf16>
    %cst_21 = arith.constant dense<0.000000e+00> : vector<16x128xf32>
    %30 = tpu.matmul %27, %29, %cst_21 {dimension_numbers = #tpu.dot_dimension_numbers<[1], [0], [0], [1], [0, 0, 1, 1], [], []>} : vector<16x128xbf16>, vector<128x128xbf16>, vector<16x128xf32> -> vector<16x128xf32>
    %c3 = arith.constant 3 : index
    %c0_22 = arith.constant 0 : index
    %31 = vector.load %arg5[%c3, %c0_22] : memref<8x128xf32, #tpu.memory_space<vmem>>, vector<1x128xf32>
    %32 = vector.broadcast %31 : vector<1x128xf32> to vector<16x128xf32>
    %33 = arith.addf %30, %32 : vector<16x128xf32>
    %cst_23 = arith.constant 0.000000e+00 : f32
    %34 = vector.broadcast %cst_23 : f32 to vector<16x128xf32>
    %35 = arith.maximumf %33, %34 : vector<16x128xf32>
    %36 = arith.truncf %35 : vector<16x128xf32> to vector<16x128xbf16>
    %c3_24 = arith.constant 3 : index
    %c0_25 = arith.constant 0 : index
    %c0_26 = arith.constant 0 : index
    %37 = vector.load %arg3[%c3_24, %c0_25, %c0_26] : memref<7x128x128xbf16, #tpu.memory_space<vmem>>, vector<1x128x128xbf16>
    %38 = vector.shape_cast %37 : vector<1x128x128xbf16> to vector<128x128xbf16>
    %cst_27 = arith.constant dense<0.000000e+00> : vector<16x128xf32>
    %39 = tpu.matmul %36, %38, %cst_27 {dimension_numbers = #tpu.dot_dimension_numbers<[1], [0], [0], [1], [0, 0, 1, 1], [], []>} : vector<16x128xbf16>, vector<128x128xbf16>, vector<16x128xf32> -> vector<16x128xf32>
    %c4 = arith.constant 4 : index
    %c0_28 = arith.constant 0 : index
    %40 = vector.load %arg5[%c4, %c0_28] : memref<8x128xf32, #tpu.memory_space<vmem>>, vector<1x128xf32>
    %41 = vector.broadcast %40 : vector<1x128xf32> to vector<16x128xf32>
    %42 = arith.addf %39, %41 : vector<16x128xf32>
    %cst_29 = arith.constant 0.000000e+00 : f32
    %43 = vector.broadcast %cst_29 : f32 to vector<16x128xf32>
    %44 = arith.maximumf %42, %43 : vector<16x128xf32>
    %45 = arith.truncf %44 : vector<16x128xf32> to vector<16x128xbf16>
    %c4_30 = arith.constant 4 : index
    %c0_31 = arith.constant 0 : index
    %c0_32 = arith.constant 0 : index
    %46 = vector.load %arg3[%c4_30, %c0_31, %c0_32] : memref<7x128x128xbf16, #tpu.memory_space<vmem>>, vector<1x128x128xbf16>
    %47 = vector.shape_cast %46 : vector<1x128x128xbf16> to vector<128x128xbf16>
    %cst_33 = arith.constant dense<0.000000e+00> : vector<16x128xf32>
    %48 = tpu.matmul %45, %47, %cst_33 {dimension_numbers = #tpu.dot_dimension_numbers<[1], [0], [0], [1], [0, 0, 1, 1], [], []>} : vector<16x128xbf16>, vector<128x128xbf16>, vector<16x128xf32> -> vector<16x128xf32>
    %c5 = arith.constant 5 : index
    %c0_34 = arith.constant 0 : index
    %49 = vector.load %arg5[%c5, %c0_34] : memref<8x128xf32, #tpu.memory_space<vmem>>, vector<1x128xf32>
    %50 = vector.broadcast %49 : vector<1x128xf32> to vector<16x128xf32>
    %51 = arith.addf %48, %50 : vector<16x128xf32>
    %cst_35 = arith.constant 0.000000e+00 : f32
    %52 = vector.broadcast %cst_35 : f32 to vector<16x128xf32>
    %53 = arith.maximumf %51, %52 : vector<16x128xf32>
    %54 = arith.truncf %53 : vector<16x128xf32> to vector<16x128xbf16>
    %c5_36 = arith.constant 5 : index
    %c0_37 = arith.constant 0 : index
    %c0_38 = arith.constant 0 : index
    %55 = vector.load %arg3[%c5_36, %c0_37, %c0_38] : memref<7x128x128xbf16, #tpu.memory_space<vmem>>, vector<1x128x128xbf16>
    %56 = vector.shape_cast %55 : vector<1x128x128xbf16> to vector<128x128xbf16>
    %cst_39 = arith.constant dense<0.000000e+00> : vector<16x128xf32>
    %57 = tpu.matmul %54, %56, %cst_39 {dimension_numbers = #tpu.dot_dimension_numbers<[1], [0], [0], [1], [0, 0, 1, 1], [], []>} : vector<16x128xbf16>, vector<128x128xbf16>, vector<16x128xf32> -> vector<16x128xf32>
    %c6 = arith.constant 6 : index
    %c0_40 = arith.constant 0 : index
    %58 = vector.load %arg5[%c6, %c0_40] : memref<8x128xf32, #tpu.memory_space<vmem>>, vector<1x128xf32>
    %59 = vector.broadcast %58 : vector<1x128xf32> to vector<16x128xf32>
    %60 = arith.addf %57, %59 : vector<16x128xf32>
    %cst_41 = arith.constant 0.000000e+00 : f32
    %61 = vector.broadcast %cst_41 : f32 to vector<16x128xf32>
    %62 = arith.maximumf %60, %61 : vector<16x128xf32>
    %63 = arith.truncf %62 : vector<16x128xf32> to vector<16x128xbf16>
    %c6_42 = arith.constant 6 : index
    %c0_43 = arith.constant 0 : index
    %c0_44 = arith.constant 0 : index
    %64 = vector.load %arg3[%c6_42, %c0_43, %c0_44] : memref<7x128x128xbf16, #tpu.memory_space<vmem>>, vector<1x128x128xbf16>
    %65 = vector.shape_cast %64 : vector<1x128x128xbf16> to vector<128x128xbf16>
    %cst_45 = arith.constant dense<0.000000e+00> : vector<16x128xf32>
    %66 = tpu.matmul %63, %65, %cst_45 {dimension_numbers = #tpu.dot_dimension_numbers<[1], [0], [0], [1], [0, 0, 1, 1], [], []>} : vector<16x128xbf16>, vector<128x128xbf16>, vector<16x128xf32> -> vector<16x128xf32>
    %c7 = arith.constant 7 : index
    %c0_46 = arith.constant 0 : index
    %67 = vector.load %arg5[%c7, %c0_46] : memref<8x128xf32, #tpu.memory_space<vmem>>, vector<1x128xf32>
    %68 = vector.broadcast %67 : vector<1x128xf32> to vector<16x128xf32>
    %69 = arith.addf %66, %68 : vector<16x128xf32>
    %cst_47 = arith.constant 0.000000e+00 : f32
    %70 = vector.broadcast %cst_47 : f32 to vector<16x128xf32>
    %71 = arith.maximumf %69, %70 : vector<16x128xf32>
    %72 = arith.truncf %71 : vector<16x128xf32> to vector<16x128xbf16>
    %c0_48 = arith.constant 0 : index
    %c0_49 = arith.constant 0 : index
    %73 = vector.load %arg4[%c0_48, %c0_49] : memref<128x16xbf16, #tpu.memory_space<vmem>>, vector<128x16xbf16>
    %cst_50 = arith.constant dense<0.000000e+00> : vector<16x16xf32>
    %74 = tpu.matmul %72, %73, %cst_50 {dimension_numbers = #tpu.dot_dimension_numbers<[1], [0], [0], [1], [0, 0, 1, 1], [], []>} : vector<16x128xbf16>, vector<128x16xbf16>, vector<16x16xf32> -> vector<16x16xf32>
    %c0_51 = arith.constant 0 : index
    %c0_52 = arith.constant 0 : index
    %75 = vector.load %arg6[%c0_51, %c0_52] : memref<1x16xf32, #tpu.memory_space<vmem>>, vector<1x16xf32>
    %76 = vector.broadcast %75 : vector<1x16xf32> to vector<16x16xf32>
    %77 = arith.addf %74, %76 : vector<16x16xf32>
    %c0_53 = arith.constant 0 : index
    %c0_54 = arith.constant 0 : index
    %78 = vector.load %arg7[%c0_53, %c0_54] : memref<16x16xf32, #tpu.memory_space<vmem>>, vector<16x16xf32>
    tpu.vector_store %arg7[%c0_53, %c0_54], %77 {strides = array<i32>} : memref<16x16xf32, #tpu.memory_space<vmem>>, vector<16x16xf32>,
    return
  }
  func.func @transform_0(%arg0: i32) -> (i32, i32) {
    %c0_i32 = arith.constant 0 : i32
    %c0_i32_0 = arith.constant 0 : i32
    return %arg0, %c0_i32 : i32, i32
  }
  func.func @transform_1(%arg0: i32) -> (i32, i32) {
    %c0_i32 = arith.constant 0 : i32
    %c0_i32_0 = arith.constant 0 : i32
    %c0_i32_1 = arith.constant 0 : i32
    return %c0_i32, %c0_i32_0 : i32, i32
  }
  func.func @transform_2(%arg0: i32) -> (i32, i32, i32) {
    %c0_i32 = arith.constant 0 : i32
    %c0_i32_0 = arith.constant 0 : i32
    %c0_i32_1 = arith.constant 0 : i32
    %c0_i32_2 = arith.constant 0 : i32
    return %c0_i32, %c0_i32_0, %c0_i32_1 : i32, i32, i32
  }
  func.func @transform_3(%arg0: i32) -> (i32, i32) {
    %c0_i32 = arith.constant 0 : i32
    %c0_i32_0 = arith.constant 0 : i32
    %c0_i32_1 = arith.constant 0 : i32
    return %c0_i32, %c0_i32_0 : i32, i32
  }
  func.func @transform_4(%arg0: i32) -> (i32, i32) {
    %c0_i32 = arith.constant 0 : i32
    %c0_i32_0 = arith.constant 0 : i32
    %c0_i32_1 = arith.constant 0 : i32
    return %c0_i32, %c0_i32_0 : i32, i32
  }
  func.func @transform_5(%arg0: i32) -> (i32, i32) {
    %c0_i32 = arith.constant 0 : i32
    %c0_i32_0 = arith.constant 0 : i32
    %c0_i32_1 = arith.constant 0 : i32
    return %c0_i32, %c0_i32_0 : i32, i32
  }
  func.func @transform_6(%arg0: i32) -> (i32, i32) {
    %c0_i32 = arith.constant 0 : i32
    %c0_i32_0 = arith.constant 0 : i32
    return %arg0, %c0_i32 : i32, i32
  }
}

</mosaic_0001>

<llo_original>
// kernel: net_forward.1
$region0: #{net_forward.1}
  #allocation0 [shape = 'u32[]', space=smem, size = 0x4, offset = 0x4, fixed_abs, tag = 'smem constant byte address 0x4 - core index']
  #allocation1 [shape = 'u32[144,128]{1,0:T(1,128)}', space=vmem, size = 0x12000, scoped, tag = 'internal scratch']
  %s0 = inlined_call_operand.vmem [shape: f32[16,16], index: 0, kind: input, shape index: {}]
  %s1 = inlined_call_operand.vmem [shape: bf16[16,128], index: 1, kind: input, shape index: {}]
  %s2 = inlined_call_operand.hbm [shape: bf16[7,128,128], index: 2, kind: input, shape index: {}]
  %s3 = inlined_call_operand.vmem [shape: bf16[128,16], index: 3, kind: input, shape index: {}]
  %s4 = inlined_call_operand.vmem [shape: f32[8,128], index: 4, kind: input, shape index: {}]
  %s5 = inlined_call_operand.vmem [shape: f32[1,16], index: 5, kind: input, shape index: {}]
  %s6 = inlined_call_operand.vmem [shape: f32[16,16], index: 6, kind: output, shape index: {}]
  %s7 = sld [smem:[#allocation0]]
  $region38: #{net_forward.1} parent=0
    _
  %s9 = ssub.s32 1, %s7
  %s10 = scalar_select 0, %s9, %s7
  $region1: #{net_forward.1} parent=0
    #allocation2 [shape = 'u8[229376]{0}', space=vmem, size = 0x38000, scoped, tag = 'input window, operand 2, single buffered']
    #allocation3 [shape = 's32[1]{0}', space=sflag, size = 0x4, scoped, tag = 'scoped memory for net_forward.1']
    %11 = vsyncpa [#allocation3], 0
    // Predicated region
    $region2: #{net_forward.1} parent=1 // pred_check
      _
    $region3: #{net_forward.1} parent=1 // pred_check_branch
      %13 = sbr.rel (0) target = $region5
    $region4: #{net_forward.1} parent=1 // pred_region
      _
    $region5: #{net_forward.1} parent=1 // pred_fallthru
      _
    // Predicated region
    $region6: #{net_forward.1} parent=1 // pred_check
      _
    $region7: #{net_forward.1} parent=1 // pred_check_branch
      %15 = sbr.rel (0) target = $region9
    $region8: #{net_forward.1} parent=1 // pred_region
      _
    $region9: #{net_forward.1} parent=1 // pred_fallthru
      _
    // Predicated region
    $region10: #{net_forward.1} parent=1 // pred_check
      _
    $region11: #{net_forward.1} parent=1 // pred_check_branch
      %17 = sbr.rel (0) target = $region13
    $region12: #{net_forward.1} parent=1 // pred_region
      %s19 = ssub.s32 7168, 7168
      %20 = vsyncadd [#allocation3], %s19
      %s21 = sshll.u32 [#allocation2], 4
      %s22 = int_to_ptr.vmem [resolvable:$true] %s21
      %27 = dma.hbm_to_vmem [thread:$0]  %s2, 7168, %s22, [#allocation3], 64, 64, 4
    $region13: #{net_forward.1} parent=1 // pred_fallthru
      _
    // Predicated region
    $region14: #{net_forward.1} parent=1 // pred_check
      _
    $region15: #{net_forward.1} parent=1 // pred_check_branch
      %29 = sbr.rel (0) target = $region17
    $region16: #{net_forward.1} parent=1 // pred_region
      _
    $region17: #{net_forward.1} parent=1 // pred_fallthru
      _
    // Predicated region
    $region18: #{net_forward.1} parent=1 // pred_check
      _
    $region19: #{net_forward.1} parent=1 // pred_check_branch
      %31 = sbr.rel (0) target = $region21
    $region20: #{net_forward.1} parent=1 // pred_region
      _
    $region21: #{net_forward.1} parent=1 // pred_fallthru
      _
    // Predicated region
    $region22: #{net_forward.1} parent=1 // pred_check
      _
    $region23: #{net_forward.1} parent=1 // pred_check_branch
      %33 = sbr.rel (0) target = $region25
    $region24: #{net_forward.1} parent=1 // pred_region
      _
    $region25: #{net_forward.1} parent=1 // pred_fallthru
      _
    // Predicated region
    $region26: #{net_forward.1} parent=1 // pred_check
      _
    $region27: #{net_forward.1} parent=1 // pred_check_branch
      %35 = sbr.rel (0) target = $region29
    $region28: #{net_forward.1} parent=1 // pred_region
      %36 = dma.done [#allocation3], 7168
    $region29: #{net_forward.1} parent=1 // pred_fallthru
      _
    %v38 = vld [vmem:[%s0] sm:$0xff]
    %v39 = vld [vmem:[%s0 + $0x8] sm:$0xff]
    %v40 = vpack.c.bf16 %v39, %v38
    %v41 = vld [vmem:[%s1] sm:$0xf]
    %v42 = vld [vmem:[%s1 + $0x4] sm:$0xf]
    %v43 = vld [vmem:[%s4] sm:$0x1]
    %v44 = vlaneseq
    %v45 = vshrl.u32 %v44, 7
    %v46 = vsub.s32 0, %v45
    %v47 = vrot.slane %v43, %v46
    %v50 = vunpack.c.l.b16 %v41
    %v51 = vunpack.c.l.b16 %v42
    %v52 = vpack.c.b16 %v51, %v50
    %vm54 = vcmask 130048
    %v56 = vsel %vm54, %v40, 0
    %58 = vmatprep.subr.bf16.mxu0 0
    %59 = vmatpush1.bf16.msra.mxu0 %v52
    %60 = vmatprep.subr.bf16.mxu0 0
    %61 = vmatpush1.bf16.msra.mxu0 0
    %62 = vmatprep.subr.bf16.mxu0 0
    %63 = vmatpush1.bf16.msra.mxu0 0
    %64 = vmatprep.subr.bf16.mxu0 0
    %65 = vmatpush1.bf16.msra.mxu0 0
    %66 = vmatprep.subr.bf16.mxu0 0
    %67 = vmatpush1.bf16.msra.mxu0 0
    %68 = vmatprep.subr.bf16.mxu0 0
    %69 = vmatpush1.bf16.msra.mxu0 0
    %70 = vmatprep.subr.bf16.mxu0 0
    %71 = vmatpush1.bf16.msra.mxu0 0
    %72 = vmatprep.subr.bf16.mxu0 0
    %73 = vmatpush1.bf16.msra.mxu0 0
    %74 = vmatprep.subr.bf16.mxu0 0
    %75 = vmatpush1.bf16.msra.mxu0 0
    %76 = vmatprep.subr.bf16.mxu0 0
    %77 = vmatpush1.bf16.msra.mxu0 0
    %78 = vmatprep.subr.bf16.mxu0 0
    %79 = vmatpush1.bf16.msra.mxu0 0
    %80 = vmatprep.subr.bf16.mxu0 0
    %81 = vmatpush1.bf16.msra.mxu0 0
    %82 = vmatprep.subr.bf16.mxu0 0
    %83 = vmatpush1.bf16.msra.mxu0 0
    %84 = vmatprep.subr.bf16.mxu0 0
    %85 = vmatpush1.bf16.msra.mxu0 0
    %86 = vmatprep.subr.bf16.mxu0 0
    %87 = vmatpush1.bf16.msra.mxu0 0
    %88 = vmatprep.subr.bf16.mxu0 0
    %89 = vmatpush1.bf16.msra.mxu0 0
    %90 = vmatprep.mubr.bf16.mxu0 0
    %91 = vmatmul.mubr.bf16.gmra.mrb[0].mxu0 %v56
    %v92 = vpop.f32.mrb[0].mxu0
    %v93 = vadd.f32 %v47, %v92
    %v94 = vpop.f32.mrb[0].mxu0
    %v95 = vpop.f32.mrb[0].mxu0
    %v96 = vadd.f32 %v47, %v95
    %v97 = vpop.f32.mrb[0].mxu0
    %98 = vdwg.mxu0
    %v99 = vmax.f32 %v93, 0.0
    %v100 = vmax.f32 %v96, 0.0
    %v101 = vpack.c.bf16 %v100, %v99
    %v102 = vld [vmem:[#allocation2] sm:$0xf]
    %v103 = vld [vmem:[#allocation2 + $0x4] sm:$0xf]
    %v104 = vld [vmem:[#allocation2 + $0x8] sm:$0xf]
    %v105 = vld [vmem:[#allocation2 + $0xc] sm:$0xf]
    %v106 = vld [vmem:[#allocation2 + $0x10] sm:$0xf]
    %v107 = vld [vmem:[#allocation2 + $0x14] sm:$0xf]
    %v108 = vld [vmem:[#allocation2 + $0x18] sm:$0xf]
    %v109 = vld [vmem:[#allocation2 + $0x1c] sm:$0xf]
    %v110 = vld [vmem:[#allocation2 + $0x20] sm:$0xf]
    %v111 = vld [vmem:[#allocation2 + $0x24] sm:$0xf]
    %v112 = vld [vmem:[#allocation2 + $0x28] sm:$0xf]
    %v113 = vld [vmem:[#allocation2 + $0x2c] sm:$0xf]
    %v114 = vld [vmem:[#allocation2 + $0x30] sm:$0xf]
    %v115 = vld [vmem:[#allocation2 + $0x34] sm:$0xf]
    %v116 = vld [vmem:[#allocation2 + $0x38] sm:$0xf]
    %v117 = vld [vmem:[#allocation2 + $0x3c] sm:$0xf]
    %v118 = vld [vmem:[%s4 + $0x1] sm:$0x1]
    %v119 = vlaneseq
    %v120 = vshrl.u32 %v119, 7
    %v121 = vsub.s32 0, %v120
    %v122 = vrot.slane %v118, %v121
    %v139 = vunpack.c.l.b16 %v102
    %v140 = vunpack.c.l.b16 %v103
    %v141 = vunpack.c.l.b16 %v104
    %v142 = vunpack.c.l.b16 %v105
    %v143 = vunpack.c.l.b16 %v106
    %v144 = vunpack.c.l.b16 %v107
    %v145 = vunpack.c.l.b16 %v108
    %v146 = vunpack.c.l.b16 %v109
    %v147 = vunpack.c.l.b16 %v110
    %v148 = vunpack.c.l.b16 %v111
    %v149 = vunpack.c.l.b16 %v112
    %v150 = vunpack.c.l.b16 %v113
    %v151 = vunpack.c.l.b16 %v114
    %v152 = vunpack.c.l.b16 %v115
    %v153 = vunpack.c.l.b16 %v116
    %v154 = vunpack.c.l.b16 %v117
    %v155 = vpack.c.b16 %v140, %v139
    %v156 = vpack.c.b16 %v142, %v141
    %v157 = vpack.c.b16 %v144, %v143
    %v158 = vpack.c.b16 %v146, %v145
    %v159 = vpack.c.b16 %v148, %v147
    %v160 = vpack.c.b16 %v150, %v149
    %v161 = vpack.c.b16 %v152, %v151
    %v162 = vpack.c.b16 %v154, %v153
    %171 = vmatprep.subr.bf16.mxu0 0
    %172 = vmatpush1.bf16.msra.mxu0 %v155
    %173 = vmatprep.subr.bf16.mxu0 0
    %174 = vmatpush1.bf16.msra.mxu0 %v156
    %175 = vmatprep.subr.bf16.mxu0 0
    %176 = vmatpush1.bf16.msra.mxu0 %v157
    %177 = vmatprep.subr.bf16.mxu0 0
    %178 = vmatpush1.bf16.msra.mxu0 %v158
    %179 = vmatprep.subr.bf16.mxu0 0
    %180 = vmatpush1.bf16.msra.mxu0 %v159
    %181 = vmatprep.subr.bf16.mxu0 0
    %182 = vmatpush1.bf16.msra.mxu0 %v160
    %183 = vmatprep.subr.bf16.mxu0 0
    %184 = vmatpush1.bf16.msra.mxu0 %v161
    %185 = vmatprep.subr.bf16.mxu0 0
    %186 = vmatpush1.bf16.msra.mxu0 %v162
    %187 = vmatprep.subr.bf16.mxu0 0
    %188 = vmatpush1.bf16.msra.mxu0 0
    %189 = vmatprep.subr.bf16.mxu0 0
    %190 = vmatpush1.bf16.msra.mxu0 0
    %191 = vmatprep.subr.bf16.mxu0 0
    %192 = vmatpush1.bf16.msra.mxu0 0
    %193 = vmatprep.subr.bf16.mxu0 0
    %194 = vmatpush1.bf16.msra.mxu0 0
    %195 = vmatprep.subr.bf16.mxu0 0
    %196 = vmatpush1.bf16.msra.mxu0 0
    %197 = vmatprep.subr.bf16.mxu0 0
    %198 = vmatpush1.bf16.msra.mxu0 0
    %199 = vmatprep.subr.bf16.mxu0 0
    %200 = vmatpush1.bf16.msra.mxu0 0
    %201 = vmatprep.subr.bf16.mxu0 0
    %202 = vmatpush1.bf16.msra.mxu0 0
    %203 = vmatprep.mubr.bf16.mxu0 0
    %204 = vmatmul.mubr.bf16.gmra.mrb[0].mxu0 %v101
    %v205 = vpop.f32.mrb[0].mxu0
    %v206 = vadd.f32 %v122, %v205
    %v207 = vpop.f32.mrb[0].mxu0
    %v208 = vpop.f32.mrb[0].mxu0
    %v209 = vadd.f32 %v122, %v208
    %v210 = vpop.f32.mrb[0].mxu0
    %211 = vdwg.mxu0
    %v212 = vmax.f32 %v206, 0.0
    %v213 = vmax.f32 %v209, 0.0
    %v214 = vpack.c.bf16 %v213, %v212
    %s215 = scalar_lea.vmem [#allocation2], 64
    %v216 = vld [vmem:[%s215] sm:$0xf]
    %v217 = vld [vmem:[%s215 + $0x4] sm:$0xf]
    %v218 = vld [vmem:[%s215 + $0x8] sm:$0xf]
    %v219 = vld [vmem:[%s215 + $0xc] sm:$0xf]
    %v220 = vld [vmem:[%s215 + $0x10] sm:$0xf]
    %v221 = vld [vmem:[%s215 + $0x14] sm:$0xf]
    %v222 = vld [vmem:[%s215 + $0x18] sm:$0xf]
    %v223 = vld [vmem:[%s215 + $0x1c] sm:$0xf]
    %v224 = vld [vmem:[%s215 + $0x20] sm:$0xf]
    %v225 = vld [vmem:[%s215 + $0x24] sm:$0xf]
    %v226 = vld [vmem:[%s215 + $0x28] sm:$0xf]
    %v227 = vld [vmem:[%s215 + $0x2c] sm:$0xf]
    %v228 = vld [vmem:[%s215 + $0x30] sm:$0xf]
    %v229 = vld [vmem:[%s215 + $0x34] sm:$0xf]
    %v230 = vld [vmem:[%s215 + $0x38] sm:$0xf]
    %v231 = vld [vmem:[%s215 + $0x3c] sm:$0xf]
    %v232 = vld [vmem:[%s4 + $0x2] sm:$0x1]
    %v233 = vlaneseq
    %v234 = vshrl.u32 %v233, 7
    %v235 = vsub.s32 0, %v234
    %v236 = vrot.slane %v232, %v235
    %v253 = vunpack.c.l.b16 %v216
    %v254 = vunpack.c.l.b16 %v217
    %v255 = vunpack.c.l.b16 %v218
    %v256 = vunpack.c.l.b16 %v219
    %v257 = vunpack.c.l.b16 %v220
    %v258 = vunpack.c.l.b16 %v221
    %v259 = vunpack.c.l.b16 %v222
    %v260 = vunpack.c.l.b16 %v223
    %v261 = vunpack.c.l.b16 %v224
    %v262 = vunpack.c.l.b16 %v225
    %v263 = vunpack.c.l.b16 %v226
    %v264 = vunpack.c.l.b16 %v227
    %v265 = vunpack.c.l.b16 %v228
    %v266 = vunpack.c.l.b16 %v229
    %v267 = vunpack.c.l.b16 %v230
    %v268 = vunpack.c.l.b16 %v231
    %v269 = vpack.c.b16 %v254, %v253
    %v270 = vpack.c.b16 %v256, %v255
    %v271 = vpack.c.b16 %v258, %v257
    %v272 = vpack.c.b16 %v260, %v259
    %v273 = vpack.c.b16 %v262, %v261
    %v274 = vpack.c.b16 %v264, %v263
    %v275 = vpack.c.b16 %v266, %v265
    %v276 = vpack.c.b16 %v268, %v267
    %285 = vmatprep.subr.bf16.mxu0 0
    %286 = vmatpush1.bf16.msra.mxu0 %v269
    %287 = vmatprep.subr.bf16.mxu0 0
    %288 = vmatpush1.bf16.msra.mxu0 %v270
    %289 = vmatprep.subr.bf16.mxu0 0
    %290 = vmatpush1.bf16.msra.mxu0 %v271
    %291 = vmatprep.subr.bf16.mxu0 0
    %292 = vmatpush1.bf16.msra.mxu0 %v272
    %293 = vmatprep.subr.bf16.mxu0 0
    %294 = vmatpush1.bf16.msra.mxu0 %v273
    %295 = vmatprep.subr.bf16.mxu0 0
    %296 = vmatpush1.bf16.msra.mxu0 %v274
    %297 = vmatprep.subr.bf16.mxu0 0
    %298 = vmatpush1.bf16.msra.mxu0 %v275
    %299 = vmatprep.subr.bf16.mxu0 0
    %300 = vmatpush1.bf16.msra.mxu0 %v276
    %301 = vmatprep.subr.bf16.mxu0 0
    %302 = vmatpush1.bf16.msra.mxu0 0
    %303 = vmatprep.subr.bf16.mxu0 0
    %304 = vmatpush1.bf16.msra.mxu0 0
    %305 = vmatprep.subr.bf16.mxu0 0
    %306 = vmatpush1.bf16.msra.mxu0 0
    %307 = vmatprep.subr.bf16.mxu0 0
    %308 = vmatpush1.bf16.msra.mxu0 0
    %309 = vmatprep.subr.bf16.mxu0 0
    %310 = vmatpush1.bf16.msra.mxu0 0
    %311 = vmatprep.subr.bf16.mxu0 0
    %312 = vmatpush1.bf16.msra.mxu0 0
    %313 = vmatprep.subr.bf16.mxu0 0
    %314 = vmatpush1.bf16.msra.mxu0 0
    %315 = vmatprep.subr.bf16.mxu0 0
    %316 = vmatpush1.bf16.msra.mxu0 0
    %317 = vmatprep.mubr.bf16.mxu0 0
    %318 = vmatmul.mubr.bf16.gmra.mrb[0].mxu0 %v214
    %v319 = vpop.f32.mrb[0].mxu0
    %v320 = vadd.f32 %v236, %v319
    %v321 = vpop.f32.mrb[0].mxu0
    %v322 = vpop.f32.mrb[0].mxu0
    %v323 = vadd.f32 %v236, %v322
    %v324 = vpop.f32.mrb[0].mxu0
    %325 = vdwg.mxu0
    %v326 = vmax.f32 %v320, 0.0
    %v327 = vmax.f32 %v323, 0.0
    %v328 = vpack.c.bf16 %v327, %v326
    %s329 = scalar_lea.vmem [#allocation2], 128
    %v330 = vld [vmem:[%s329] sm:$0xf]
    %v331 = vld [vmem:[%s329 + $0x4] sm:$0xf]
    %v332 = vld [vmem:[%s329 + $0x8] sm:$0xf]
    %v333 = vld [vmem:[%s329 + $0xc] sm:$0xf]
    %v334 = vld [vmem:[%s329 + $0x10] sm:$0xf]
    %v335 = vld [vmem:[%s329 + $0x14] sm:$0xf]
    %v336 = vld [vmem:[%s329 + $0x18] sm:$0xf]
    %v337 = vld [vmem:[%s329 + $0x1c] sm:$0xf]
    %v338 = vld [vmem:[%s329 + $0x20] sm:$0xf]
    %v339 = vld [vmem:[%s329 + $0x24] sm:$0xf]
    %v340 = vld [vmem:[%s329 + $0x28] sm:$0xf]
    %v341 = vld [vmem:[%s329 + $0x2c] sm:$0xf]
    %v342 = vld [vmem:[%s329 + $0x30] sm:$0xf]
    %v343 = vld [vmem:[%s329 + $0x34] sm:$0xf]
    %v344 = vld [vmem:[%s329 + $0x38] sm:$0xf]
    %v345 = vld [vmem:[%s329 + $0x3c] sm:$0xf]
    %v346 = vld [vmem:[%s4 + $0x3] sm:$0x1]
    %v347 = vlaneseq
    %v348 = vshrl.u32 %v347, 7
    %v349 = vsub.s32 0, %v348
    %v350 = vrot.slane %v346, %v349
    %v367 = vunpack.c.l.b16 %v330
    %v368 = vunpack.c.l.b16 %v331
    %v369 = vunpack.c.l.b16 %v332
    %v370 = vunpack.c.l.b16 %v333
    %v371 = vunpack.c.l.b16 %v334
    %v372 = vunpack.c.l.b16 %v335
    %v373 = vunpack.c.l.b16 %v336
    %v374 = vunpack.c.l.b16 %v337
    %v375 = vunpack.c.l.b16 %v338
    %v376 = vunpack.c.l.b16 %v339
    %v377 = vunpack.c.l.b16 %v340
    %v378 = vunpack.c.l.b16 %v341
    %v379 = vunpack.c.l.b16 %v342
    %v380 = vunpack.c.l.b16 %v343
    %v381 = vunpack.c.l.b16 %v344
    %v382 = vunpack.c.l.b16 %v345
    %v383 = vpack.c.b16 %v368, %v367
    %v384 = vpack.c.b16 %v370, %v369
    %v385 = vpack.c.b16 %v372, %v371
    %v386 = vpack.c.b16 %v374, %v373
    %v387 = vpack.c.b16 %v376, %v375
    %v388 = vpack.c.b16 %v378, %v377
    %v389 = vpack.c.b16 %v380, %v379
    %v390 = vpack.c.b16 %v382, %v381
    %399 = vmatprep.subr.bf16.mxu0 0
    %400 = vmatpush1.bf16.msra.mxu0 %v383
    %401 = vmatprep.subr.bf16.mxu0 0
    %402 = vmatpush1.bf16.msra.mxu0 %v384
    %403 = vmatprep.subr.bf16.mxu0 0
    %404 = vmatpush1.bf16.msra.mxu0 %v385
    %405 = vmatprep.subr.bf16.mxu0 0
    %406 = vmatpush1.bf16.msra.mxu0 %v386
    %407 = vmatprep.subr.bf16.mxu0 0
    %408 = vmatpush1.bf16.msra.mxu0 %v387
    %409 = vmatprep.subr.bf16.mxu0 0
    %410 = vmatpush1.bf16.msra.mxu0 %v388
    %411 = vmatprep.subr.bf16.mxu0 0
    %412 = vmatpush1.bf16.msra.mxu0 %v389
    %413 = vmatprep.subr.bf16.mxu0 0
    %414 = vmatpush1.bf16.msra.mxu0 %v390
    %415 = vmatprep.subr.bf16.mxu0 0
    %416 = vmatpush1.bf16.msra.mxu0 0
    %417 = vmatprep.subr.bf16.mxu0 0
    %418 = vmatpush1.bf16.msra.mxu0 0
    %419 = vmatprep.subr.bf16.mxu0 0
    %420 = vmatpush1.bf16.msra.mxu0 0
    %421 = vmatprep.subr.bf16.mxu0 0
    %422 = vmatpush1.bf16.msra.mxu0 0
    %423 = vmatprep.subr.bf16.mxu0 0
    %424 = vmatpush1.bf16.msra.mxu0 0
    %425 = vmatprep.subr.bf16.mxu0 0
    %426 = vmatpush1.bf16.msra.mxu0 0
    %427 = vmatprep.subr.bf16.mxu0 0
    %428 = vmatpush1.bf16.msra.mxu0 0
    %429 = vmatprep.subr.bf16.mxu0 0
    %430 = vmatpush1.bf16.msra.mxu0 0
    %431 = vmatprep.mubr.bf16.mxu0 0
    %432 = vmatmul.mubr.bf16.gmra.mrb[0].mxu0 %v328
    %v433 = vpop.f32.mrb[0].mxu0
    %v434 = vadd.f32 %v350, %v433
    %v435 = vpop.f32.mrb[0].mxu0
    %v436 = vpop.f32.mrb[0].mxu0
    %v437 = vadd.f32 %v350, %v436
    %v438 = vpop.f32.mrb[0].mxu0
    %439 = vdwg.mxu0
    %v440 = vmax.f32 %v434, 0.0
    %v441 = vmax.f32 %v437, 0.0
    %v442 = vpack.c.bf16 %v441, %v440
    %s443 = scalar_lea.vmem [#allocation2], 192
    %v444 = vld [vmem:[%s443] sm:$0xf]
    %v445 = vld [vmem:[%s443 + $0x4] sm:$0xf]
    %v446 = vld [vmem:[%s443 + $0x8] sm:$0xf]
    %v447 = vld [vmem:[%s443 + $0xc] sm:$0xf]
    %v448 = vld [vmem:[%s443 + $0x10] sm:$0xf]
    %v449 = vld [vmem:[%s443 + $0x14] sm:$0xf]
    %v450 = vld [vmem:[%s443 + $0x18] sm:$0xf]
    %v451 = vld [vmem:[%s443 + $0x1c] sm:$0xf]
    %v452 = vld [vmem:[%s443 + $0x20] sm:$0xf]
    %v453 = vld [vmem:[%s443 + $0x24] sm:$0xf]
    %v454 = vld [vmem:[%s443 + $0x28] sm:$0xf]
    %v455 = vld [vmem:[%s443 + $0x2c] sm:$0xf]
    %v456 = vld [vmem:[%s443 + $0x30] sm:$0xf]
    %v457 = vld [vmem:[%s443 + $0x34] sm:$0xf]
    %v458 = vld [vmem:[%s443 + $0x38] sm:$0xf]
    %v459 = vld [vmem:[%s443 + $0x3c] sm:$0xf]
    %v460 = vld [vmem:[%s4 + $0x4] sm:$0x1]
    %v461 = vlaneseq
    %v462 = vshrl.u32 %v461, 7
    %v463 = vsub.s32 0, %v462
    %v464 = vrot.slane %v460, %v463
    %v481 = vunpack.c.l.b16 %v444
    %v482 = vunpack.c.l.b16 %v445
    %v483 = vunpack.c.l.b16 %v446
    %v484 = vunpack.c.l.b16 %v447
    %v485 = vunpack.c.l.b16 %v448
    %v486 = vunpack.c.l.b16 %v449
    %v487 = vunpack.c.l.b16 %v450
    %v488 = vunpack.c.l.b16 %v451
    %v489 = vunpack.c.l.b16 %v452
    %v490 = vunpack.c.l.b16 %v453
    %v491 = vunpack.c.l.b16 %v454
    %v492 = vunpack.c.l.b16 %v455
    %v493 = vunpack.c.l.b16 %v456
    %v494 = vunpack.c.l.b16 %v457
    %v495 = vunpack.c.l.b16 %v458
    %v496 = vunpack.c.l.b16 %v459
    %v497 = vpack.c.b16 %v482, %v481
    %v498 = vpack.c.b16 %v484, %v483
    %v499 = vpack.c.b16 %v486, %v485
    %v500 = vpack.c.b16 %v488, %v487
    %v501 = vpack.c.b16 %v490, %v489
    %v502 = vpack.c.b16 %v492, %v491
    %v503 = vpack.c.b16 %v494, %v493
    %v504 = vpack.c.b16 %v496, %v495
    %513 = vmatprep.subr.bf16.mxu0 0
    %514 = vmatpush1.bf16.msra.mxu0 %v497
    %515 = vmatprep.subr.bf16.mxu0 0
    %516 = vmatpush1.bf16.msra.mxu0 %v498
    %517 = vmatprep.subr.bf16.mxu0 0
    %518 = vmatpush1.bf16.msra.mxu0 %v499
    %519 = vmatprep.subr.bf16.mxu0 0
    %520 = vmatpush1.bf16.msra.mxu0 %v500
    %521 = vmatprep.subr.bf16.mxu0 0
    %522 = vmatpush1.bf16.msra.mxu0 %v501
    %523 = vmatprep.subr.bf16.mxu0 0
    %524 = vmatpush1.bf16.msra.mxu0 %v502
    %525 = vmatprep.subr.bf16.mxu0 0
    %526 = vmatpush1.bf16.msra.mxu0 %v503
    %527 = vmatprep.subr.bf16.mxu0 0
    %528 = vmatpush1.bf16.msra.mxu0 %v504
    %529 = vmatprep.subr.bf16.mxu0 0
    %530 = vmatpush1.bf16.msra.mxu0 0
    %531 = vmatprep.subr.bf16.mxu0 0
    %532 = vmatpush1.bf16.msra.mxu0 0
    %533 = vmatprep.subr.bf16.mxu0 0
    %534 = vmatpush1.bf16.msra.mxu0 0
    %535 = vmatprep.subr.bf16.mxu0 0
    %536 = vmatpush1.bf16.msra.mxu0 0
    %537 = vmatprep.subr.bf16.mxu0 0
    %538 = vmatpush1.bf16.msra.mxu0 0
    %539 = vmatprep.subr.bf16.mxu0 0
    %540 = vmatpush1.bf16.msra.mxu0 0
    %541 = vmatprep.subr.bf16.mxu0 0
    %542 = vmatpush1.bf16.msra.mxu0 0
    %543 = vmatprep.subr.bf16.mxu0 0
    %544 = vmatpush1.bf16.msra.mxu0 0
    %545 = vmatprep.mubr.bf16.mxu0 0
    %546 = vmatmul.mubr.bf16.gmra.mrb[0].mxu0 %v442
    %v547 = vpop.f32.mrb[0].mxu0
    %v548 = vadd.f32 %v464, %v547
    %v549 = vpop.f32.mrb[0].mxu0
    %v550 = vpop.f32.mrb[0].mxu0
    %v551 = vadd.f32 %v464, %v550
    %v552 = vpop.f32.mrb[0].mxu0
    %553 = vdwg.mxu0
    %v554 = vmax.f32 %v548, 0.0
    %v555 = vmax.f32 %v551, 0.0
    %v556 = vpack.c.bf16 %v555, %v554
    %s557 = scalar_lea.vmem [#allocation2], 256
    %v558 = vld [vmem:[%s557] sm:$0xf]
    %v559 = vld [vmem:[%s557 + $0x4] sm:$0xf]
    %v560 = vld [vmem:[%s557 + $0x8] sm:$0xf]
    %v561 = vld [vmem:[%s557 + $0xc] sm:$0xf]
    %v562 = vld [vmem:[%s557 + $0x10] sm:$0xf]
    %v563 = vld [vmem:[%s557 + $0x14] sm:$0xf]
    %v564 = vld [vmem:[%s557 + $0x18] sm:$0xf]
    %v565 = vld [vmem:[%s557 + $0x1c] sm:$0xf]
    %v566 = vld [vmem:[%s557 + $0x20] sm:$0xf]
    %v567 = vld [vmem:[%s557 + $0x24] sm:$0xf]
    %v568 = vld [vmem:[%s557 + $0x28] sm:$0xf]
    %v569 = vld [vmem:[%s557 + $0x2c] sm:$0xf]
    %v570 = vld [vmem:[%s557 + $0x30] sm:$0xf]
    %v571 = vld [vmem:[%s557 + $0x34] sm:$0xf]
    %v572 = vld [vmem:[%s557 + $0x38] sm:$0xf]
    %v573 = vld [vmem:[%s557 + $0x3c] sm:$0xf]
    %v574 = vld [vmem:[%s4 + $0x5] sm:$0x1]
    %v575 = vlaneseq
    %v576 = vshrl.u32 %v575, 7
    %v577 = vsub.s32 0, %v576
    %v578 = vrot.slane %v574, %v577
    %v595 = vunpack.c.l.b16 %v558
    %v596 = vunpack.c.l.b16 %v559
    %v597 = vunpack.c.l.b16 %v560
    %v598 = vunpack.c.l.b16 %v561
    %v599 = vunpack.c.l.b16 %v562
    %v600 = vunpack.c.l.b16 %v563
    %v601 = vunpack.c.l.b16 %v564
    %v602 = vunpack.c.l.b16 %v565
    %v603 = vunpack.c.l.b16 %v566
    %v604 = vunpack.c.l.b16 %v567
    %v605 = vunpack.c.l.b16 %v568
    %v606 = vunpack.c.l.b16 %v569
    %v607 = vunpack.c.l.b16 %v570
    %v608 = vunpack.c.l.b16 %v571
    %v609 = vunpack.c.l.b16 %v572
    %v610 = vunpack.c.l.b16 %v573
    %v611 = vpack.c.b16 %v596, %v595
    %v612 = vpack.c.b16 %v598, %v597
    %v613 = vpack.c.b16 %v600, %v599
    %v614 = vpack.c.b16 %v602, %v601
    %v615 = vpack.c.b16 %v604, %v603
    %v616 = vpack.c.b16 %v606, %v605
    %v617 = vpack.c.b16 %v608, %v607
    %v618 = vpack.c.b16 %v610, %v609
    %627 = vmatprep.subr.bf16.mxu0 0
    %628 = vmatpush1.bf16.msra.mxu0 %v611
    %629 = vmatprep.subr.bf16.mxu0 0
    %630 = vmatpush1.bf16.msra.mxu0 %v612
    %631 = vmatprep.subr.bf16.mxu0 0
    %632 = vmatpush1.bf16.msra.mxu0 %v613
    %633 = vmatprep.subr.bf16.mxu0 0
    %634 = vmatpush1.bf16.msra.mxu0 %v614
    %635 = vmatprep.subr.bf16.mxu0 0
    %636 = vmatpush1.bf16.msra.mxu0 %v615
    %637 = vmatprep.subr.bf16.mxu0 0
    %638 = vmatpush1.bf16.msra.mxu0 %v616
    %639 = vmatprep.subr.bf16.mxu0 0
    %640 = vmatpush1.bf16.msra.mxu0 %v617
    %641 = vmatprep.subr.bf16.mxu0 0
    %642 = vmatpush1.bf16.msra.mxu0 %v618
    %643 = vmatprep.subr.bf16.mxu0 0
    %644 = vmatpush1.bf16.msra.mxu0 0
    %645 = vmatprep.subr.bf16.mxu0 0
    %646 = vmatpush1.bf16.msra.mxu0 0
    %647 = vmatprep.subr.bf16.mxu0 0
    %648 = vmatpush1.bf16.msra.mxu0 0
    %649 = vmatprep.subr.bf16.mxu0 0
    %650 = vmatpush1.bf16.msra.mxu0 0
    %651 = vmatprep.subr.bf16.mxu0 0
    %652 = vmatpush1.bf16.msra.mxu0 0
    %653 = vmatprep.subr.bf16.mxu0 0
    %654 = vmatpush1.bf16.msra.mxu0 0
    %655 = vmatprep.subr.bf16.mxu0 0
    %656 = vmatpush1.bf16.msra.mxu0 0
    %657 = vmatprep.subr.bf16.mxu0 0
    %658 = vmatpush1.bf16.msra.mxu0 0
    %659 = vmatprep.mubr.bf16.mxu0 0
    %660 = vmatmul.mubr.bf16.gmra.mrb[0].mxu0 %v556
    %v661 = vpop.f32.mrb[0].mxu0
    %v662 = vadd.f32 %v578, %v661
    %v663 = vpop.f32.mrb[0].mxu0
    %v664 = vpop.f32.mrb[0].mxu0
    %v665 = vadd.f32 %v578, %v664
    %v666 = vpop.f32.mrb[0].mxu0
    %667 = vdwg.mxu0
    %v668 = vmax.f32 %v662, 0.0
    %v669 = vmax.f32 %v665, 0.0
    %v670 = vpack.c.bf16 %v669, %v668
    %s671 = scalar_lea.vmem [#allocation2], 320
    %v672 = vld [vmem:[%s671] sm:$0xf]
    %v673 = vld [vmem:[%s671 + $0x4] sm:$0xf]
    %v674 = vld [vmem:[%s671 + $0x8] sm:$0xf]
    %v675 = vld [vmem:[%s671 + $0xc] sm:$0xf]
    %v676 = vld [vmem:[%s671 + $0x10] sm:$0xf]
    %v677 = vld [vmem:[%s671 + $0x14] sm:$0xf]
    %v678 = vld [vmem:[%s671 + $0x18] sm:$0xf]
    %v679 = vld [vmem:[%s671 + $0x1c] sm:$0xf]
    %v680 = vld [vmem:[%s671 + $0x20] sm:$0xf]
    %v681 = vld [vmem:[%s671 + $0x24] sm:$0xf]
    %v682 = vld [vmem:[%s671 + $0x28] sm:$0xf]
    %v683 = vld [vmem:[%s671 + $0x2c] sm:$0xf]
    %v684 = vld [vmem:[%s671 + $0x30] sm:$0xf]
    %v685 = vld [vmem:[%s671 + $0x34] sm:$0xf]
    %v686 = vld [vmem:[%s671 + $0x38] sm:$0xf]
    %v687 = vld [vmem:[%s671 + $0x3c] sm:$0xf]
    %v688 = vld [vmem:[%s4 + $0x6] sm:$0x1]
    %v689 = vlaneseq
    %v690 = vshrl.u32 %v689, 7
    %v691 = vsub.s32 0, %v690
    %v692 = vrot.slane %v688, %v691
    %v709 = vunpack.c.l.b16 %v672
    %v710 = vunpack.c.l.b16 %v673
    %v711 = vunpack.c.l.b16 %v674
    %v712 = vunpack.c.l.b16 %v675
    %v713 = vunpack.c.l.b16 %v676
    %v714 = vunpack.c.l.b16 %v677
    %v715 = vunpack.c.l.b16 %v678
    %v716 = vunpack.c.l.b16 %v679
    %v717 = vunpack.c.l.b16 %v680
    %v718 = vunpack.c.l.b16 %v681
    %v719 = vunpack.c.l.b16 %v682
    %v720 = vunpack.c.l.b16 %v683
    %v721 = vunpack.c.l.b16 %v684
    %v722 = vunpack.c.l.b16 %v685
    %v723 = vunpack.c.l.b16 %v686
    %v724 = vunpack.c.l.b16 %v687
    %v725 = vpack.c.b16 %v710, %v709
    %v726 = vpack.c.b16 %v712, %v711
    %v727 = vpack.c.b16 %v714, %v713
    %v728 = vpack.c.b16 %v716, %v715
    %v729 = vpack.c.b16 %v718, %v717
    %v730 = vpack.c.b16 %v720, %v719
    %v731 = vpack.c.b16 %v722, %v721
    %v732 = vpack.c.b16 %v724, %v723
    %741 = vmatprep.subr.bf16.mxu0 0
    %742 = vmatpush1.bf16.msra.mxu0 %v725
    %743 = vmatprep.subr.bf16.mxu0 0
    %744 = vmatpush1.bf16.msra.mxu0 %v726
    %745 = vmatprep.subr.bf16.mxu0 0
    %746 = vmatpush1.bf16.msra.mxu0 %v727
    %747 = vmatprep.subr.bf16.mxu0 0
    %748 = vmatpush1.bf16.msra.mxu0 %v728
    %749 = vmatprep.subr.bf16.mxu0 0
    %750 = vmatpush1.bf16.msra.mxu0 %v729
    %751 = vmatprep.subr.bf16.mxu0 0
    %752 = vmatpush1.bf16.msra.mxu0 %v730
    %753 = vmatprep.subr.bf16.mxu0 0
    %754 = vmatpush1.bf16.msra.mxu0 %v731
    %755 = vmatprep.subr.bf16.mxu0 0
    %756 = vmatpush1.bf16.msra.mxu0 %v732
    %757 = vmatprep.subr.bf16.mxu0 0
    %758 = vmatpush1.bf16.msra.mxu0 0
    %759 = vmatprep.subr.bf16.mxu0 0
    %760 = vmatpush1.bf16.msra.mxu0 0
    %761 = vmatprep.subr.bf16.mxu0 0
    %762 = vmatpush1.bf16.msra.mxu0 0
    %763 = vmatprep.subr.bf16.mxu0 0
    %764 = vmatpush1.bf16.msra.mxu0 0
    %765 = vmatprep.subr.bf16.mxu0 0
    %766 = vmatpush1.bf16.msra.mxu0 0
    %767 = vmatprep.subr.bf16.mxu0 0
    %768 = vmatpush1.bf16.msra.mxu0 0
    %769 = vmatprep.subr.bf16.mxu0 0
    %770 = vmatpush1.bf16.msra.mxu0 0
    %771 = vmatprep.subr.bf16.mxu0 0
    %772 = vmatpush1.bf16.msra.mxu0 0
    %773 = vmatprep.mubr.bf16.mxu0 0
    %774 = vmatmul.mubr.bf16.gmra.mrb[0].mxu0 %v670
    %v775 = vpop.f32.mrb[0].mxu0
    %v776 = vadd.f32 %v692, %v775
    %v777 = vpop.f32.mrb[0].mxu0
    %v778 = vpop.f32.mrb[0].mxu0
    %v779 = vadd.f32 %v692, %v778
    %v780 = vpop.f32.mrb[0].mxu0
    %781 = vdwg.mxu0
    %v782 = vmax.f32 %v776, 0.0
    %v783 = vmax.f32 %v779, 0.0
    %v784 = vpack.c.bf16 %v783, %v782
    %s785 = scalar_lea.vmem [#allocation2], 384
    %v786 = vld [vmem:[%s785] sm:$0xf]
    %v787 = vld [vmem:[%s785 + $0x4] sm:$0xf]
    %v788 = vld [vmem:[%s785 + $0x8] sm:$0xf]
    %v789 = vld [vmem:[%s785 + $0xc] sm:$0xf]
    %v790 = vld [vmem:[%s785 + $0x10] sm:$0xf]
    %v791 = vld [vmem:[%s785 + $0x14] sm:$0xf]
    %v792 = vld [vmem:[%s785 + $0x18] sm:$0xf]
    %v793 = vld [vmem:[%s785 + $0x1c] sm:$0xf]
    %v794 = vld [vmem:[%s785 + $0x20] sm:$0xf]
    %v795 = vld [vmem:[%s785 + $0x24] sm:$0xf]
    %v796 = vld [vmem:[%s785 + $0x28] sm:$0xf]
    %v797 = vld [vmem:[%s785 + $0x2c] sm:$0xf]
    %v798 = vld [vmem:[%s785 + $0x30] sm:$0xf]
    %v799 = vld [vmem:[%s785 + $0x34] sm:$0xf]
    %v800 = vld [vmem:[%s785 + $0x38] sm:$0xf]
    %v801 = vld [vmem:[%s785 + $0x3c] sm:$0xf]
    %v802 = vld [vmem:[%s4 + $0x7] sm:$0x1]
    %v803 = vlaneseq
    %v804 = vshrl.u32 %v803, 7
    %v805 = vsub.s32 0, %v804
    %v806 = vrot.slane %v802, %v805
    %v823 = vunpack.c.l.b16 %v786
    %v824 = vunpack.c.l.b16 %v787
    %v825 = vunpack.c.l.b16 %v788
    %v826 = vunpack.c.l.b16 %v789
    %v827 = vunpack.c.l.b16 %v790
    %v828 = vunpack.c.l.b16 %v791
    %v829 = vunpack.c.l.b16 %v792
    %v830 = vunpack.c.l.b16 %v793
    %v831 = vunpack.c.l.b16 %v794
    %v832 = vunpack.c.l.b16 %v795
    %v833 = vunpack.c.l.b16 %v796
    %v834 = vunpack.c.l.b16 %v797
    %v835 = vunpack.c.l.b16 %v798
    %v836 = vunpack.c.l.b16 %v799
    %v837 = vunpack.c.l.b16 %v800
    %v838 = vunpack.c.l.b16 %v801
    %v839 = vpack.c.b16 %v824, %v823
    %v840 = vpack.c.b16 %v826, %v825
    %v841 = vpack.c.b16 %v828, %v827
    %v842 = vpack.c.b16 %v830, %v829
    %v843 = vpack.c.b16 %v832, %v831
    %v844 = vpack.c.b16 %v834, %v833
    %v845 = vpack.c.b16 %v836, %v835
    %v846 = vpack.c.b16 %v838, %v837
    %855 = vmatprep.subr.bf16.mxu0 0
    %856 = vmatpush1.bf16.msra.mxu0 %v839
    %857 = vmatprep.subr.bf16.mxu0 0
    %858 = vmatpush1.bf16.msra.mxu0 %v840
    %859 = vmatprep.subr.bf16.mxu0 0
    %860 = vmatpush1.bf16.msra.mxu0 %v841
    %861 = vmatprep.subr.bf16.mxu0 0
    %862 = vmatpush1.bf16.msra.mxu0 %v842
    %863 = vmatprep.subr.bf16.mxu0 0
    %864 = vmatpush1.bf16.msra.mxu0 %v843
    %865 = vmatprep.subr.bf16.mxu0 0
    %866 = vmatpush1.bf16.msra.mxu0 %v844
    %867 = vmatprep.subr.bf16.mxu0 0
    %868 = vmatpush1.bf16.msra.mxu0 %v845
    %869 = vmatprep.subr.bf16.mxu0 0
    %870 = vmatpush1.bf16.msra.mxu0 %v846
    %871 = vmatprep.subr.bf16.mxu0 0
    %872 = vmatpush1.bf16.msra.mxu0 0
    %873 = vmatprep.subr.bf16.mxu0 0
    %874 = vmatpush1.bf16.msra.mxu0 0
    %875 = vmatprep.subr.bf16.mxu0 0
    %876 = vmatpush1.bf16.msra.mxu0 0
    %877 = vmatprep.subr.bf16.mxu0 0
    %878 = vmatpush1.bf16.msra.mxu0 0
    %879 = vmatprep.subr.bf16.mxu0 0
    %880 = vmatpush1.bf16.msra.mxu0 0
    %881 = vmatprep.subr.bf16.mxu0 0
    %882 = vmatpush1.bf16.msra.mxu0 0
    %883 = vmatprep.subr.bf16.mxu0 0
    %884 = vmatpush1.bf16.msra.mxu0 0
    %885 = vmatprep.subr.bf16.mxu0 0
    %886 = vmatpush1.bf16.msra.mxu0 0
    %887 = vmatprep.mubr.bf16.mxu0 0
    %888 = vmatmul.mubr.bf16.gmra.mrb[0].mxu0 %v784
    %v889 = vpop.f32.mrb[0].mxu0
    %v890 = vadd.f32 %v806, %v889
    %v891 = vpop.f32.mrb[0].mxu0
    %v892 = vpop.f32.mrb[0].mxu0
    %v893 = vadd.f32 %v806, %v892
    %v894 = vpop.f32.mrb[0].mxu0
    %895 = vdwg.mxu0
    %v896 = vmax.f32 %v890, 0.0
    %v897 = vmax.f32 %v893, 0.0
    %v898 = vpack.c.bf16 %v897, %v896
    %v899 = vld [vmem:[%s3] sm:$0xf]
    %v900 = vld [vmem:[%s3 + $0x4] sm:$0xf]
    %v901 = vld [vmem:[%s3 + $0x8] sm:$0xf]
    %v902 = vld [vmem:[%s3 + $0xc] sm:$0xf]
    %v903 = vld [vmem:[%s3 + $0x10] sm:$0xf]
    %v904 = vld [vmem:[%s3 + $0x14] sm:$0xf]
    %v905 = vld [vmem:[%s3 + $0x18] sm:$0xf]
    %v906 = vld [vmem:[%s3 + $0x1c] sm:$0xf]
    %v907 = vld [vmem:[%s3 + $0x20] sm:$0xf]
    %v908 = vld [vmem:[%s3 + $0x24] sm:$0xf]
    %v909 = vld [vmem:[%s3 + $0x28] sm:$0xf]
    %v910 = vld [vmem:[%s3 + $0x2c] sm:$0xf]
    %v911 = vld [vmem:[%s3 + $0x30] sm:$0xf]
    %v912 = vld [vmem:[%s3 + $0x34] sm:$0xf]
    %v913 = vld [vmem:[%s3 + $0x38] sm:$0xf]
    %v914 = vld [vmem:[%s3 + $0x3c] sm:$0xf]
    %v915 = vld [vmem:[%s5] sm:$0x1]
    %v917 = vlaneseq
    %v918 = vshrl.u32 %v917, 7
    %v919 = vsub.s32 0, %v918
    %v920 = vrot.slane %v915, %v919
    %v938 = vunpack.c.l.b16 %v899
    %v939 = vunpack.c.l.b16 %v900
    %v940 = vunpack.c.l.b16 %v901
    %v941 = vunpack.c.l.b16 %v902
    %v942 = vunpack.c.l.b16 %v903
    %v943 = vunpack.c.l.b16 %v904
    %v944 = vunpack.c.l.b16 %v905
    %v945 = vunpack.c.l.b16 %v906
    %v946 = vunpack.c.l.b16 %v907
    %v947 = vunpack.c.l.b16 %v908
    %v948 = vunpack.c.l.b16 %v909
    %v949 = vunpack.c.l.b16 %v910
    %v950 = vunpack.c.l.b16 %v911
    %v951 = vunpack.c.l.b16 %v912
    %v952 = vunpack.c.l.b16 %v913
    %v953 = vunpack.c.l.b16 %v914
    %v954 = vpack.c.b16 %v939, %v938
    %v955 = vpack.c.b16 %v941, %v940
    %v956 = vpack.c.b16 %v943, %v942
    %v957 = vpack.c.b16 %v945, %v944
    %v958 = vpack.c.b16 %v947, %v946
    %v959 = vpack.c.b16 %v949, %v948
    %v960 = vpack.c.b16 %v951, %v950
    %v961 = vpack.c.b16 %v953, %v952
    %970 = vmatprep.subr.bf16.mxu0 0
    %971 = vmatpush1.bf16.msra.mxu0 %v954
    %972 = vmatprep.subr.bf16.mxu0 0
    %973 = vmatpush1.bf16.msra.mxu0 %v955
    %974 = vmatprep.subr.bf16.mxu0 0
    %975 = vmatpush1.bf16.msra.mxu0 %v956
    %976 = vmatprep.subr.bf16.mxu0 0
    %977 = vmatpush1.bf16.msra.mxu0 %v957
    %978 = vmatprep.subr.bf16.mxu0 0
    %979 = vmatpush1.bf16.msra.mxu0 %v958
    %980 = vmatprep.subr.bf16.mxu0 0
    %981 = vmatpush1.bf16.msra.mxu0 %v959
    %982 = vmatprep.subr.bf16.mxu0 0
    %983 = vmatpush1.bf16.msra.mxu0 %v960
    %984 = vmatprep.subr.bf16.mxu0 0
    %985 = vmatpush1.bf16.msra.mxu0 %v961
    %986 = vmatprep.subr.bf16.mxu0 0
    %987 = vmatpush1.bf16.msra.mxu0 0
    %988 = vmatprep.subr.bf16.mxu0 0
    %989 = vmatpush1.bf16.msra.mxu0 0
    %990 = vmatprep.subr.bf16.mxu0 0
    %991 = vmatpush1.bf16.msra.mxu0 0
    %992 = vmatprep.subr.bf16.mxu0 0
    %993 = vmatpush1.bf16.msra.mxu0 0
    %994 = vmatprep.subr.bf16.mxu0 0
    %995 = vmatpush1.bf16.msra.mxu0 0
    %996 = vmatprep.subr.bf16.mxu0 0
    %997 = vmatpush1.bf16.msra.mxu0 0
    %998 = vmatprep.subr.bf16.mxu0 0
    %999 = vmatpush1.bf16.msra.mxu0 0
    %1000 = vmatprep.subr.bf16.mxu0 0
    %1001 = vmatpush1.bf16.msra.mxu0 0
    %1002 = vmatprep.mubr.bf16.mxu0 0
    %1003 = vmatmul.mubr.bf16.gmra.mrb[0].mxu0 %v898
    %v1004 = vpop.f32.mrb[0].mxu0
    %v1005 = vadd.f32 %v920, %v1004
    %v1006 = vpop.f32.mrb[0].mxu0
    %v1007 = vpop.f32.mrb[0].mxu0
    %v1008 = vadd.f32 %v920, %v1007
    %v1009 = vpop.f32.mrb[0].mxu0
    %1010 = vdwg.mxu0
    %1011 = vst.msk [vmem:[%s6] sm:$0xff] %vm54, %v1005
    %1012 = vst.msk [vmem:[%s6 + $0x8] sm:$0xff] %vm54, %v1008
    // Predicated region
    $region30: #{net_forward.1} parent=1 // pred_check
      _
    $region31: #{net_forward.1} parent=1 // pred_check_branch
      %1014 = sbr.rel (0) target = $region33
    $region32: #{net_forward.1} parent=1 // pred_region
      _
    $region33: #{net_forward.1} parent=1 // pred_fallthru
      _
    // Predicated region
    $region34: #{net_forward.1} parent=1 // pred_check
      _
    $region35: #{net_forward.1} parent=1 // pred_check_branch
      %1016 = sbr.rel (0) target = $region37
    $region36: #{net_forward.1} parent=1 // pred_region
      _
    $region37: #{net_forward.1} parent=1 // pred_fallthru
      _
    %1017 = vsyncpa [#allocation3], 1

</llo_original>
